<compile_context>
chip_gen: v7x
topology: tpu7x:2x2x1
jax: 0.10.0
libtpu: 0.0.40
codegen_flags: <defaults>
</compile_context>

<pallas_src>
import jax
import jax.numpy as jnp
from jax.experimental import pallas as pl
from jax.experimental.pallas import tpu as pltpu


def _unet_down_kernel(z_ref, w_ref, o_ref):
    # z_ref: (B_pack, H_out+1, W_out+1, 4*C_in)  bf16  space-to-depth input (+1 halo)
    # w_ref: (2, 2, 4*C_in, C_out)               bf16  conv weight in 2x2 form
    # o_ref: (1, HW, B_pack*C_out)               f32
    b_pack, hp1, wp1, kc = z_ref.shape
    h_out, w_out = hp1 - 1, wp1 - 1
    hw = h_out * w_out
    c_out = w_ref.shape[-1]

    # Conv as 4 shifted matmuls on the MXU, f32 accumulation.
    accs = []
    for b in range(b_pack):
        acc = jnp.zeros((hw, c_out), jnp.float32)
        for a in range(2):          # vertical halo shift
            for s in range(2):      # horizontal halo shift
                lhs = z_ref[b, a:a + h_out, s:s + w_out, :]   # (H_out, W_out, 4*C_in) bf16
                lhs = lhs.reshape(hw, kc)
                acc = acc + jnp.dot(lhs, w_ref[a, s],
                                    preferred_element_type=jnp.float32)
        accs.append(acc)

    # Pack the per-image results along the lane axis -> one wide, lane-dense store.
    y = accs[0] if b_pack == 1 else jnp.concatenate(accs, axis=-1)  # (HW, B_pack*C_out) f32

    # InstanceNorm2d (affine=False, eps=1e-5): per-(n, c) stats over the spatial
    # axis, biased variance, one-pass formulation, all in f32.
    mean = jnp.mean(y, axis=0, keepdims=True)
    msq = jnp.mean(y * y, axis=0, keepdims=True)
    var = jnp.maximum(msq - mean * mean, 0.0)
    y = (y - mean) * jax.lax.rsqrt(var + 1e-5)

    # LeakyReLU(0.2)
    y = jnp.maximum(y, 0.2 * y)

    o_ref[0] = y.astype(o_ref.dtype)


def unet_down(x_nchw, weight, *, normalize=True):
    """UNetDown forward.

    x_nchw: (N, C_in, H, W) float32
    weight: (C_out, C_in, 4, 4) float32  (PyTorch Conv2d layout)
    returns: (N, C_out, H//2, W//2) float32
    """
    # TODO(synk): normalize=False / dropout>0 variants not wired into the kernel
    # (default UNetDown(normalize=True, dropout=0.0) path is implemented).
    assert normalize, "only the default normalize=True path is implemented"

    N, C_in, H, W = x_nchw.shape
    C_out = weight.shape[0]
    assert H % 2 == 0 and W % 2 == 0, "even spatial dims expected"
    H_out, W_out = H // 2, W // 2
    HW = H_out * W_out
    KC = 4 * C_in

    # Pack batch images along the lane axis when C_out < 128 so the output store
    # is lane-dense (largest divisor of N not exceeding 128 // C_out).
    limit = max(1, 128 // C_out)
    b_pack = 1
    for d in range(1, min(N, limit) + 1):
        if N % d == 0:
            b_pack = d
    G = N // b_pack

    # --- glue: pad + space-to-depth (same byte count as input; no inflation) --
    x = jnp.transpose(x_nchw, (0, 2, 3, 1))                     # NHWC
    x_pad = jnp.pad(x, ((0, 0), (1, 1), (1, 1), (0, 0)))        # pad=1
    # z[n, p, q, (r*2+s)*C_in + c] = x_pad[n, 2p+r, 2q+s, c]
    z = x_pad.reshape(N, H_out + 1, 2, W_out + 1, 2, C_in)      # (n, p, r, q, s, c)
    z = jnp.transpose(z, (0, 1, 3, 2, 4, 5))                    # (n, p, q, r, s, c)
    z = z.reshape(N, H_out + 1, W_out + 1, KC).astype(jnp.bfloat16)

    # Weight -> 2x2-conv form: w2[a, b, (r*2+s)*C_in + c, co] = w[co, c, 2a+r, 2b+s]
    w6 = weight.reshape(C_out, C_in, 2, 2, 2, 2)                # (co, c, a, r, b, s)
    w2 = jnp.transpose(w6, (2, 4, 3, 5, 1, 0))                  # (a, b, r, s, c, co)
    w2 = w2.reshape(2, 2, KC, C_out).astype(jnp.bfloat16)

    # --- Pallas kernel: 4 shifted bf16 matmuls + instance norm + leaky relu ---
    out = pl.pallas_call(
        _unet_down_kernel,
        out_shape=jax.ShapeDtypeStruct((G, HW, b_pack * C_out), jnp.float32),
        grid_spec=pltpu.PrefetchScalarGridSpec(
            num_scalar_prefetch=0,
            grid=(G,),
            in_specs=[
                pl.BlockSpec((b_pack, H_out + 1, W_out + 1, KC),
                             lambda g: (g, 0, 0, 0)),
                # Constant index_map: same weight block every grid step, so its
                # DMA is not re-issued across steps.
                pl.BlockSpec((2, 2, KC, C_out), lambda g: (0, 0, 0, 0)),
            ],
            out_specs=pl.BlockSpec((1, HW, b_pack * C_out), lambda g: (g, 0, 0)),
        ),
        compiler_params=pltpu.CompilerParams(
            dimension_semantics=("parallel",),
            vmem_limit_bytes=64 * 1024 * 1024,
        ),
    )(z, w2)

    # --- glue: unpack lanes and go back to NCHW --------------------------------
    out = out.reshape(G, H_out, W_out, b_pack, C_out)
    out = jnp.transpose(out, (0, 3, 4, 1, 2))                   # (G, b_pack, C_out, H_out, W_out)
    return out.reshape(N, C_out, H_out, W_out)


if __name__ == "__main__":
    key = jax.random.PRNGKey(0)
    k_x, k_w = jax.random.split(key)

    N, C_in, H, W = 2, 4, 16, 16
    C_out = 8

    x = jax.random.normal(k_x, (N, C_in, H, W), dtype=jnp.float32)
    # Deterministic synthetic conv weight (PyTorch layout: out, in, kh, kw).
    weight = 0.1 * jax.random.normal(k_w, (C_out, C_in, 4, 4), dtype=jnp.float32)

    y = unet_down(x, weight)
    jax.block_until_ready(y)

    assert y.shape == (N, C_out, H // 2, W // 2), y.shape
    print("KERNEL_OK")
</pallas_src>

<mosaic_0001>
module attributes {stable_mosaic.version = 11 : i64} {
  func.func @_unet_down_kernel(%arg0: i32, %arg1: memref<2x9x9x16xbf16, #tpu.memory_space<vmem>>, %arg2: memref<2x2x16x8xbf16, #tpu.memory_space<vmem>>, %arg3: memref<1x64x16xf32, #tpu.memory_space<vmem>>) attributes {dimension_semantics = [#tpu.dimension_semantics<parallel>], iteration_bounds = array<i64: 1>, scalar_prefetch = 0 : i64, scratch_operands = 0 : i64, tpu.core_type = #tpu.core_type<tc>, window_params = [{transform_indices = @transform_0, window_bounds = array<i64: 2, 9, 9, 16>}, {pipeline_mode = #tpu.pipeline_mode<synchronous>, transform_indices = @transform_1, window_bounds = array<i64: 2, 2, 16, 8>}, {transform_indices = @transform_2, window_bounds = array<i64: 1, 64, 16>}]} {
    %cst = arith.constant 0.000000e+00 : f32
    %0 = vector.broadcast %cst : f32 to vector<64x8xf32>
    %c0 = arith.constant 0 : index
    %c0_0 = arith.constant 0 : index
    %c0_1 = arith.constant 0 : index
    %c0_2 = arith.constant 0 : index
    %1 = vector.load %arg1[%c0, %c0_0, %c0_1, %c0_2] : memref<2x9x9x16xbf16, #tpu.memory_space<vmem>>, vector<1x8x8x16xbf16>
    %2 = vector.shape_cast %1 : vector<1x8x8x16xbf16> to vector<8x8x16xbf16>
    %3 = vector.shape_cast %2 : vector<8x8x16xbf16> to vector<64x16xbf16>
    %c0_3 = arith.constant 0 : index
    %c0_4 = arith.constant 0 : index
    %c0_5 = arith.constant 0 : index
    %c0_6 = arith.constant 0 : index
    %4 = vector.load %arg2[%c0_3, %c0_4, %c0_5, %c0_6] : memref<2x2x16x8xbf16, #tpu.memory_space<vmem>>, vector<1x1x16x8xbf16>
    %5 = vector.shape_cast %4 : vector<1x1x16x8xbf16> to vector<16x8xbf16>
    %cst_7 = arith.constant dense<0.000000e+00> : vector<64x8xf32>
    %6 = tpu.matmul %3, %5, %cst_7 {dimension_numbers = #tpu.dot_dimension_numbers<[1], [0], [0], [1], [0, 0, 1, 1], [], []>} : vector<64x16xbf16>, vector<16x8xbf16>, vector<64x8xf32> -> vector<64x8xf32>
    %7 = arith.addf %0, %6 : vector<64x8xf32>
    %c0_8 = arith.constant 0 : index
    %c0_9 = arith.constant 0 : index
    %c1 = arith.constant 1 : index
    %c0_10 = arith.constant 0 : index
    %8 = vector.load %arg1[%c0_8, %c0_9, %c1, %c0_10] : memref<2x9x9x16xbf16, #tpu.memory_space<vmem>>, vector<1x8x8x16xbf16>
    %9 = vector.shape_cast %8 : vector<1x8x8x16xbf16> to vector<8x8x16xbf16>
    %10 = vector.shape_cast %9 : vector<8x8x16xbf16> to vector<64x16xbf16>
    %c0_11 = arith.constant 0 : index
    %c1_12 = arith.constant 1 : index
    %c0_13 = arith.constant 0 : index
    %c0_14 = arith.constant 0 : index
    %11 = vector.load %arg2[%c0_11, %c1_12, %c0_13, %c0_14] : memref<2x2x16x8xbf16, #tpu.memory_space<vmem>>, vector<1x1x16x8xbf16>
    %12 = vector.shape_cast %11 : vector<1x1x16x8xbf16> to vector<16x8xbf16>
    %cst_15 = arith.constant dense<0.000000e+00> : vector<64x8xf32>
    %13 = tpu.matmul %10, %12, %cst_15 {dimension_numbers = #tpu.dot_dimension_numbers<[1], [0], [0], [1], [0, 0, 1, 1], [], []>} : vector<64x16xbf16>, vector<16x8xbf16>, vector<64x8xf32> -> vector<64x8xf32>
    %14 = arith.addf %7, %13 : vector<64x8xf32>
    %c0_16 = arith.constant 0 : index
    %c1_17 = arith.constant 1 : index
    %c0_18 = arith.constant 0 : index
    %c0_19 = arith.constant 0 : index
    %15 = vector.load %arg1[%c0_16, %c1_17, %c0_18, %c0_19] : memref<2x9x9x16xbf16, #tpu.memory_space<vmem>>, vector<1x8x8x16xbf16>
    %16 = vector.shape_cast %15 : vector<1x8x8x16xbf16> to vector<8x8x16xbf16>
    %17 = vector.shape_cast %16 : vector<8x8x16xbf16> to vector<64x16xbf16>
    %c1_20 = arith.constant 1 : index
    %c0_21 = arith.constant 0 : index
    %c0_22 = arith.constant 0 : index
    %c0_23 = arith.constant 0 : index
    %18 = vector.load %arg2[%c1_20, %c0_21, %c0_22, %c0_23] : memref<2x2x16x8xbf16, #tpu.memory_space<vmem>>, vector<1x1x16x8xbf16>
    %19 = vector.shape_cast %18 : vector<1x1x16x8xbf16> to vector<16x8xbf16>
    %cst_24 = arith.constant dense<0.000000e+00> : vector<64x8xf32>
    %20 = tpu.matmul %17, %19, %cst_24 {dimension_numbers = #tpu.dot_dimension_numbers<[1], [0], [0], [1], [0, 0, 1, 1], [], []>} : vector<64x16xbf16>, vector<16x8xbf16>, vector<64x8xf32> -> vector<64x8xf32>
    %21 = arith.addf %14, %20 : vector<64x8xf32>
    %c0_25 = arith.constant 0 : index
    %c1_26 = arith.constant 1 : index
    %c1_27 = arith.constant 1 : index
    %c0_28 = arith.constant 0 : index
    %22 = vector.load %arg1[%c0_25, %c1_26, %c1_27, %c0_28] : memref<2x9x9x16xbf16, #tpu.memory_space<vmem>>, vector<1x8x8x16xbf16>
    %23 = vector.shape_cast %22 : vector<1x8x8x16xbf16> to vector<8x8x16xbf16>
    %24 = vector.shape_cast %23 : vector<8x8x16xbf16> to vector<64x16xbf16>
    %c1_29 = arith.constant 1 : index
    %c1_30 = arith.constant 1 : index
    %c0_31 = arith.constant 0 : index
    %c0_32 = arith.constant 0 : index
    %25 = vector.load %arg2[%c1_29, %c1_30, %c0_31, %c0_32] : memref<2x2x16x8xbf16, #tpu.memory_space<vmem>>, vector<1x1x16x8xbf16>
    %26 = vector.shape_cast %25 : vector<1x1x16x8xbf16> to vector<16x8xbf16>
    %cst_33 = arith.constant dense<0.000000e+00> : vector<64x8xf32>
    %27 = tpu.matmul %24, %26, %cst_33 {dimension_numbers = #tpu.dot_dimension_numbers<[1], [0], [0], [1], [0, 0, 1, 1], [], []>} : vector<64x16xbf16>, vector<16x8xbf16>, vector<64x8xf32> -> vector<64x8xf32>
    %28 = arith.addf %21, %27 : vector<64x8xf32>
    %cst_34 = arith.constant 0.000000e+00 : f32
    %29 = vector.broadcast %cst_34 : f32 to vector<64x8xf32>
    %c1_35 = arith.constant 1 : index
    %c0_36 = arith.constant 0 : index
    %c0_37 = arith.constant 0 : index
    %c0_38 = arith.constant 0 : index
    %30 = vector.load %arg1[%c1_35, %c0_36, %c0_37, %c0_38] : memref<2x9x9x16xbf16, #tpu.memory_space<vmem>>, vector<1x8x8x16xbf16>
    %31 = vector.shape_cast %30 : vector<1x8x8x16xbf16> to vector<8x8x16xbf16>
    %32 = vector.shape_cast %31 : vector<8x8x16xbf16> to vector<64x16xbf16>
    %c0_39 = arith.constant 0 : index
    %c0_40 = arith.constant 0 : index
    %c0_41 = arith.constant 0 : index
    %c0_42 = arith.constant 0 : index
    %33 = vector.load %arg2[%c0_39, %c0_40, %c0_41, %c0_42] : memref<2x2x16x8xbf16, #tpu.memory_space<vmem>>, vector<1x1x16x8xbf16>
    %34 = vector.shape_cast %33 : vector<1x1x16x8xbf16> to vector<16x8xbf16>
    %cst_43 = arith.constant dense<0.000000e+00> : vector<64x8xf32>
    %35 = tpu.matmul %32, %34, %cst_43 {dimension_numbers = #tpu.dot_dimension_numbers<[1], [0], [0], [1], [0, 0, 1, 1], [], []>} : vector<64x16xbf16>, vector<16x8xbf16>, vector<64x8xf32> -> vector<64x8xf32>
    %36 = arith.addf %29, %35 : vector<64x8xf32>
    %c1_44 = arith.constant 1 : index
    %c0_45 = arith.constant 0 : index
    %c1_46 = arith.constant 1 : index
    %c0_47 = arith.constant 0 : index
    %37 = vector.load %arg1[%c1_44, %c0_45, %c1_46, %c0_47] : memref<2x9x9x16xbf16, #tpu.memory_space<vmem>>, vector<1x8x8x16xbf16>
    %38 = vector.shape_cast %37 : vector<1x8x8x16xbf16> to vector<8x8x16xbf16>
    %39 = vector.shape_cast %38 : vector<8x8x16xbf16> to vector<64x16xbf16>
    %c0_48 = arith.constant 0 : index
    %c1_49 = arith.constant 1 : index
    %c0_50 = arith.constant 0 : index
    %c0_51 = arith.constant 0 : index
    %40 = vector.load %arg2[%c0_48, %c1_49, %c0_50, %c0_51] : memref<2x2x16x8xbf16, #tpu.memory_space<vmem>>, vector<1x1x16x8xbf16>
    %41 = vector.shape_cast %40 : vector<1x1x16x8xbf16> to vector<16x8xbf16>
    %cst_52 = arith.constant dense<0.000000e+00> : vector<64x8xf32>
    %42 = tpu.matmul %39, %41, %cst_52 {dimension_numbers = #tpu.dot_dimension_numbers<[1], [0], [0], [1], [0, 0, 1, 1], [], []>} : vector<64x16xbf16>, vector<16x8xbf16>, vector<64x8xf32> -> vector<64x8xf32>
    %43 = arith.addf %36, %42 : vector<64x8xf32>
    %c1_53 = arith.constant 1 : index
    %c1_54 = arith.constant 1 : index
    %c0_55 = arith.constant 0 : index
    %c0_56 = arith.constant 0 : index
    %44 = vector.load %arg1[%c1_53, %c1_54, %c0_55, %c0_56] : memref<2x9x9x16xbf16, #tpu.memory_space<vmem>>, vector<1x8x8x16xbf16>
    %45 = vector.shape_cast %44 : vector<1x8x8x16xbf16> to vector<8x8x16xbf16>
    %46 = vector.shape_cast %45 : vector<8x8x16xbf16> to vector<64x16xbf16>
    %c1_57 = arith.constant 1 : index
    %c0_58 = arith.constant 0 : index
    %c0_59 = arith.constant 0 : index
    %c0_60 = arith.constant 0 : index
    %47 = vector.load %arg2[%c1_57, %c0_58, %c0_59, %c0_60] : memref<2x2x16x8xbf16, #tpu.memory_space<vmem>>, vector<1x1x16x8xbf16>
    %48 = vector.shape_cast %47 : vector<1x1x16x8xbf16> to vector<16x8xbf16>
    %cst_61 = arith.constant dense<0.000000e+00> : vector<64x8xf32>
    %49 = tpu.matmul %46, %48, %cst_61 {dimension_numbers = #tpu.dot_dimension_numbers<[1], [0], [0], [1], [0, 0, 1, 1], [], []>} : vector<64x16xbf16>, vector<16x8xbf16>, vector<64x8xf32> -> vector<64x8xf32>
    %50 = arith.addf %43, %49 : vector<64x8xf32>
    %c1_62 = arith.constant 1 : index
    %c1_63 = arith.constant 1 : index
    %c1_64 = arith.constant 1 : index
    %c0_65 = arith.constant 0 : index
    %51 = vector.load %arg1[%c1_62, %c1_63, %c1_64, %c0_65] : memref<2x9x9x16xbf16, #tpu.memory_space<vmem>>, vector<1x8x8x16xbf16>
    %52 = vector.shape_cast %51 : vector<1x8x8x16xbf16> to vector<8x8x16xbf16>
    %53 = vector.shape_cast %52 : vector<8x8x16xbf16> to vector<64x16xbf16>
    %c1_66 = arith.constant 1 : index
    %c1_67 = arith.constant 1 : index
    %c0_68 = arith.constant 0 : index
    %c0_69 = arith.constant 0 : index
    %54 = vector.load %arg2[%c1_66, %c1_67, %c0_68, %c0_69] : memref<2x2x16x8xbf16, #tpu.memory_space<vmem>>, vector<1x1x16x8xbf16>
    %55 = vector.shape_cast %54 : vector<1x1x16x8xbf16> to vector<16x8xbf16>
    %cst_70 = arith.constant dense<0.000000e+00> : vector<64x8xf32>
    %56 = tpu.matmul %53, %55, %cst_70 {dimension_numbers = #tpu.dot_dimension_numbers<[1], [0], [0], [1], [0, 0, 1, 1], [], []>} : vector<64x16xbf16>, vector<16x8xbf16>, vector<64x8xf32> -> vector<64x8xf32>
    %57 = arith.addf %50, %56 : vector<64x8xf32>
    %58 = tpu.concatenate %28, %57 in 1 : vector<64x8xf32>, vector<64x8xf32> -> vector<64x16xf32>
    %cst_71 = arith.constant dense<0.000000e+00> : vector<16xf32>
    %59 = vector.multi_reduction <add>, %58, %cst_71 [0] : vector<64x16xf32> to vector<16xf32>
    %60 = vector.shape_cast %59 : vector<16xf32> to vector<1x16xf32>
    %cst_72 = arith.constant 6.400000e+01 : f32
    %61 = vector.broadcast %cst_72 : f32 to vector<1x16xf32>
    %62 = arith.divf %60, %61 : vector<1x16xf32>
    %63 = arith.mulf %58, %58 : vector<64x16xf32>
    %cst_73 = arith.constant dense<0.000000e+00> : vector<16xf32>
    %64 = vector.multi_reduction <add>, %63, %cst_73 [0] : vector<64x16xf32> to vector<16xf32>
    %65 = vector.shape_cast %64 : vector<16xf32> to vector<1x16xf32>
    %cst_74 = arith.constant 6.400000e+01 : f32
    %66 = vector.broadcast %cst_74 : f32 to vector<1x16xf32>
    %67 = arith.divf %65, %66 : vector<1x16xf32>
    %68 = arith.mulf %62, %62 : vector<1x16xf32>
    %69 = arith.subf %67, %68 : vector<1x16xf32>
    %cst_75 = arith.constant 0.000000e+00 : f32
    %70 = vector.broadcast %cst_75 : f32 to vector<1x16xf32>
    %71 = arith.maximumf %69, %70 : vector<1x16xf32>
    %72 = vector.broadcast %62 : vector<1x16xf32> to vector<64x16xf32>
    %73 = arith.subf %58, %72 : vector<64x16xf32>
    %cst_76 = arith.constant 9.99999974E-6 : f32
    %74 = vector.broadcast %cst_76 : f32 to vector<1x16xf32>
    %75 = arith.addf %71, %74 : vector<1x16xf32>
    %76 = math.rsqrt %75 : vector<1x16xf32>
    %77 = vector.broadcast %76 : vector<1x16xf32> to vector<64x16xf32>
    %78 = arith.mulf %73, %77 : vector<64x16xf32>
    %cst_77 = arith.constant 2.000000e-01 : f32
    %79 = vector.broadcast %cst_77 : f32 to vector<64x16xf32>
    %80 = arith.mulf %79, %78 : vector<64x16xf32>
    %81 = arith.maximumf %78, %80 : vector<64x16xf32>
    %c0_78 = arith.constant 0 : index
    %c0_79 = arith.constant 0 : index
    %c0_80 = arith.constant 0 : index
    %82 = vector.load %arg3[%c0_78, %c0_79, %c0_80] : memref<1x64x16xf32, #tpu.memory_space<vmem>>, vector<1x64x16xf32>
    %83 = vector.shape_cast %82 : vector<1x64x16xf32> to vector<64x16xf32>
    %84 = vector.shape_cast %81 : vector<64x16xf32> to vector<1x64x16xf32>
    tpu.vector_store %arg3[%c0_78, %c0_79, %c0_80], %84 {strides = array<i32>} : memref<1x64x16xf32, #tpu.memory_space<vmem>>, vector<1x64x16xf32>,
    return
  }
  func.func @transform_0(%arg0: i32) -> (i32, i32, i32, i32) {
    %c0_i32 = arith.constant 0 : i32
    %c0_i32_0 = arith.constant 0 : i32
    %c0_i32_1 = arith.constant 0 : i32
    %c0_i32_2 = arith.constant 0 : i32
    return %arg0, %c0_i32, %c0_i32_0, %c0_i32_1 : i32, i32, i32, i32
  }
  func.func @transform_1(%arg0: i32) -> (i32, i32, i32, i32) {
    %c0_i32 = arith.constant 0 : i32
    %c0_i32_0 = arith.constant 0 : i32
    %c0_i32_1 = arith.constant 0 : i32
    %c0_i32_2 = arith.constant 0 : i32
    %c0_i32_3 = arith.constant 0 : i32
    return %c0_i32, %c0_i32_0, %c0_i32_1, %c0_i32_2 : i32, i32, i32, i32
  }
  func.func @transform_2(%arg0: i32) -> (i32, i32, i32) {
    %c0_i32 = arith.constant 0 : i32
    %c0_i32_0 = arith.constant 0 : i32
    %c0_i32_1 = arith.constant 0 : i32
    return %arg0, %c0_i32, %c0_i32_0 : i32, i32, i32
  }
}

</mosaic_0001>

<llo_original>
// kernel: tpu_custom_call.1
$region0: #{tpu_custom_call.1}
  #allocation0 [shape = 'u32[]', space=smem, size = 0x4, offset = 0x4, fixed_abs, tag = 'smem constant byte address 0x4 - core index']
  #allocation1 [shape = 'u32[144,128]{1,0:T(1,128)}', space=vmem, size = 0x12000, scoped, tag = 'internal scratch']
  %s0 = inlined_call_operand.hbm [shape: bf16[2,9,9,16], index: 0, kind: input, shape index: {}]
  %s1 = inlined_call_operand.hbm [shape: bf16[2,2,16,8], index: 1, kind: input, shape index: {}]
  %s2 = inlined_call_operand.hbm [shape: f32[1,64,16], index: 2, kind: output, shape index: {}]
  %s3 = sld [smem:[#allocation0]]
  $region26: #{tpu_custom_call.1} parent=0
    _
  %s5 = ssub.s32 1, %s3
  %s6 = scalar_select 0, %s5, %s3
  $region1: #{tpu_custom_call.1} parent=0
    #allocation2 [shape = 'u8[73728]{0}', space=vmem, size = 0x12000, scoped, tag = 'input window, operand 0, single buffered']
    #allocation3 [shape = 's32[1]{0}', space=sflag, size = 0x4, scoped, tag = 'scoped memory for tpu_custom_call.1']
    #allocation4 [shape = 's32[1]{0}', space=sflag, size = 0x4, scoped, tag = 'scoped memory for tpu_custom_call.1']
    #allocation5 [shape = 'u8[16384]{0}', space=vmem, size = 0x4000, scoped, tag = 'input window, operand 1, single buffered']
    #allocation6 [shape = 's32[1]{0}', space=sflag, size = 0x4, scoped, tag = 'scoped memory for tpu_custom_call.1']
    #allocation7 [shape = 'u8[32768]{0}', space=vmem, size = 0x8000, scoped, tag = 'output window, operand 0, single buffered']
    %7 = vsyncpa [#allocation3], 0
    %8 = vsyncpa [#allocation6], 0
    %9 = vsyncpa [#allocation4], 0
    // Predicated region
    $region2: #{tpu_custom_call.1} parent=1 // pred_check
      _
    $region3: #{tpu_custom_call.1} parent=1 // pred_check_branch
      %11 = sbr.rel (0) target = $region5
    $region4: #{tpu_custom_call.1} parent=1 // pred_region
      %s13 = ssub.s32 2304, 2304
      %14 = vsyncadd [#allocation3], %s13
      %s15 = sshll.u32 [#allocation2], 4
      %s16 = int_to_ptr.vmem [resolvable:$true] %s15
      %21 = dma.hbm_to_vmem [thread:$0]  %s0, 2304, %s16, [#allocation3], 64, 64, 4
    $region5: #{tpu_custom_call.1} parent=1 // pred_fallthru
      _
    // Predicated region
    $region6: #{tpu_custom_call.1} parent=1 // pred_check
      _
    $region7: #{tpu_custom_call.1} parent=1 // pred_check_branch
      %23 = sbr.rel (0) target = $region9
    $region8: #{tpu_custom_call.1} parent=1 // pred_region
      %s25 = ssub.s32 512, 512
      %26 = vsyncadd [#allocation6], %s25
      %s27 = sshll.u32 [#allocation5], 4
      %s28 = int_to_ptr.vmem [resolvable:$true] %s27
      %33 = dma.hbm_to_vmem [thread:$0]  %s1, 512, %s28, [#allocation6], 64, 64, 4
    $region9: #{tpu_custom_call.1} parent=1 // pred_fallthru
      _
    // Predicated region
    $region10: #{tpu_custom_call.1} parent=1 // pred_check
      _
    $region11: #{tpu_custom_call.1} parent=1 // pred_check_branch
      %35 = sbr.rel (0) target = $region13
    $region12: #{tpu_custom_call.1} parent=1 // pred_region
      %36 = dma.done [#allocation3], 2304
    $region13: #{tpu_custom_call.1} parent=1 // pred_fallthru
      _
    // Predicated region
    $region14: #{tpu_custom_call.1} parent=1 // pred_check
      _
    $region15: #{tpu_custom_call.1} parent=1 // pred_check_branch
      %38 = sbr.rel (0) target = $region17
    $region16: #{tpu_custom_call.1} parent=1 // pred_region
      %39 = dma.done [#allocation6], 512
    $region17: #{tpu_custom_call.1} parent=1 // pred_fallthru
      _
    %v41 = vld [vmem:[#allocation2] sm:$0xf]
    %v42 = vld [vmem:[#allocation2 + $0x8] sm:$0xf]
    %v43 = vld [vmem:[#allocation2 + $0x10] sm:$0xf]
    %v44 = vld [vmem:[#allocation2 + $0x18] sm:$0xf]
    %v45 = vld [vmem:[#allocation2 + $0x20] sm:$0xf]
    %v46 = vld [vmem:[#allocation2 + $0x28] sm:$0xf]
    %v47 = vld [vmem:[#allocation2 + $0x30] sm:$0xf]
    %v48 = vld [vmem:[#allocation2 + $0x38] sm:$0xf]
    %v49 = vld [vmem:[#allocation5] sm:$0xf]
    %v50 = vld [vmem:[#allocation5 + $0x4] sm:$0xf]
    %v51 = vld [vmem:[#allocation2 + $0x4] sm:$0x1]
    %v52 = vld [vmem:[#allocation2 + $0xc] sm:$0x1]
    %v53 = vld [vmem:[#allocation2 + $0x14] sm:$0x1]
    %v54 = vld [vmem:[#allocation2 + $0x1c] sm:$0x1]
    %v55 = vld [vmem:[#allocation2 + $0x24] sm:$0x1]
    %v56 = vld [vmem:[#allocation2 + $0x2c] sm:$0x1]
    %v57 = vld [vmem:[#allocation2 + $0x34] sm:$0x1]
    %v58 = vld [vmem:[#allocation2 + $0x3c] sm:$0x1]
    %vm59 = vsmask.f32 3328
    %vm60 = vsmask.f32 7440
    %vm61 = vmor %vm59, %vm60
    %v63 = vshrl.u32 %v41, 16
    %v65 = vrot.slane %v63, 4
    %v66 = vshll.u32 %v41, 16
    %v68 = vrot.slane %v66, 5
    %v69 = vor.u32 %v65, %v68
    %v70 = vrot.slane %v69, 4
    %v72 = vshll.u32 %v51, 16
    %v74 = vrot.slane %v72, 5
    %v75 = vsel %vm61, %v70, %v74
    %v77 = vshrl.u32 %v42, 16
    %v79 = vrot.slane %v77, 4
    %v80 = vshll.u32 %v42, 16
    %v82 = vrot.slane %v80, 5
    %v83 = vor.u32 %v79, %v82
    %v84 = vrot.slane %v83, 4
    %v86 = vshll.u32 %v52, 16
    %v88 = vrot.slane %v86, 5
    %v89 = vsel %vm61, %v84, %v88
    %v91 = vshrl.u32 %v43, 16
    %v93 = vrot.slane %v91, 4
    %v94 = vshll.u32 %v43, 16
    %v96 = vrot.slane %v94, 5
    %v97 = vor.u32 %v93, %v96
    %v98 = vrot.slane %v97, 4
    %v100 = vshll.u32 %v53, 16
    %v102 = vrot.slane %v100, 5
    %v103 = vsel %vm61, %v98, %v102
    %v105 = vshrl.u32 %v44, 16
    %v107 = vrot.slane %v105, 4
    %v108 = vshll.u32 %v44, 16
    %v110 = vrot.slane %v108, 5
    %v111 = vor.u32 %v107, %v110
    %v112 = vrot.slane %v111, 4
    %v114 = vshll.u32 %v54, 16
    %v116 = vrot.slane %v114, 5
    %v117 = vsel %vm61, %v112, %v116
    %v119 = vshrl.u32 %v45, 16
    %v121 = vrot.slane %v119, 4
    %v122 = vshll.u32 %v45, 16
    %v124 = vrot.slane %v122, 5
    %v125 = vor.u32 %v121, %v124
    %v126 = vrot.slane %v125, 4
    %v128 = vshll.u32 %v55, 16
    %v130 = vrot.slane %v128, 5
    %v131 = vsel %vm61, %v126, %v130
    %v133 = vshrl.u32 %v46, 16
    %v135 = vrot.slane %v133, 4
    %v136 = vshll.u32 %v46, 16
    %v138 = vrot.slane %v136, 5
    %v139 = vor.u32 %v135, %v138
    %v140 = vrot.slane %v139, 4
    %v142 = vshll.u32 %v56, 16
    %v144 = vrot.slane %v142, 5
    %v145 = vsel %vm61, %v140, %v144
    %v147 = vshrl.u32 %v47, 16
    %v149 = vrot.slane %v147, 4
    %v150 = vshll.u32 %v47, 16
    %v152 = vrot.slane %v150, 5
    %v153 = vor.u32 %v149, %v152
    %v154 = vrot.slane %v153, 4
    %v156 = vshll.u32 %v57, 16
    %v158 = vrot.slane %v156, 5
    %v159 = vsel %vm61, %v154, %v158
    %v161 = vshrl.u32 %v48, 16
    %v163 = vrot.slane %v161, 4
    %v164 = vshll.u32 %v48, 16
    %v166 = vrot.slane %v164, 5
    %v167 = vor.u32 %v163, %v166
    %v168 = vrot.slane %v167, 4
    %v170 = vshll.u32 %v58, 16
    %v172 = vrot.slane %v170, 5
    %v173 = vsel %vm61, %v168, %v172
    %s174 = scalar_lea.vmem [#allocation5], 8
    %v175 = vld [vmem:[%s174] sm:$0xf]
    %v176 = vld [vmem:[%s174 + $0x4] sm:$0xf]
    %v177 = vunpack.c.l.b16 %v75
    %v178 = vunpack.c.l.b16 %v89
    %v179 = vunpack.c.l.b16 %v103
    %v180 = vunpack.c.l.b16 %v117
    %v181 = vunpack.c.l.b16 %v131
    %v182 = vunpack.c.l.b16 %v145
    %v183 = vunpack.c.l.b16 %v159
    %v184 = vunpack.c.l.b16 %v173
    %v185 = vpack.c.b16 %v178, %v177
    %v186 = vpack.c.b16 %v180, %v179
    %v187 = vpack.c.b16 %v182, %v181
    %v188 = vpack.c.b16 %v184, %v183
    %v191 = vunpack.c.l.b16 %v175
    %v192 = vunpack.c.l.b16 %v176
    %v193 = vpack.c.b16 %v192, %v191
    %vm195 = vcmask 130048
    %v197 = vsel %vm195, %v185, 0
    %v200 = vsel %vm195, %v186, 0
    %v203 = vsel %vm195, %v187, 0
    %v206 = vsel %vm195, %v188, 0
    %208 = vmatprep.subr.bf16.mxu0 0
    %209 = vmatpush1.bf16.msra.mxu0 %v193
    %210 = vmatprep.subr.bf16.mxu0 0
    %211 = vmatpush1.bf16.msra.mxu0 0
    %212 = vmatprep.subr.bf16.mxu0 0
    %213 = vmatpush1.bf16.msra.mxu0 0
    %214 = vmatprep.subr.bf16.mxu0 0
    %215 = vmatpush1.bf16.msra.mxu0 0
    %216 = vmatprep.subr.bf16.mxu0 0
    %217 = vmatpush1.bf16.msra.mxu0 0
    %218 = vmatprep.subr.bf16.mxu0 0
    %219 = vmatpush1.bf16.msra.mxu0 0
    %220 = vmatprep.subr.bf16.mxu0 0
    %221 = vmatpush1.bf16.msra.mxu0 0
    %222 = vmatprep.subr.bf16.mxu0 0
    %223 = vmatpush1.bf16.msra.mxu0 0
    %224 = vmatprep.subr.bf16.mxu0 0
    %225 = vmatpush1.bf16.msra.mxu0 0
    %226 = vmatprep.subr.bf16.mxu0 0
    %227 = vmatpush1.bf16.msra.mxu0 0
    %228 = vmatprep.subr.bf16.mxu0 0
    %229 = vmatpush1.bf16.msra.mxu0 0
    %230 = vmatprep.subr.bf16.mxu0 0
    %231 = vmatpush1.bf16.msra.mxu0 0
    %232 = vmatprep.subr.bf16.mxu0 0
    %233 = vmatpush1.bf16.msra.mxu0 0
    %234 = vmatprep.subr.bf16.mxu0 0
    %235 = vmatpush1.bf16.msra.mxu0 0
    %236 = vmatprep.subr.bf16.mxu0 0
    %237 = vmatpush1.bf16.msra.mxu0 0
    %238 = vmatprep.subr.bf16.mxu0 0
    %239 = vmatpush1.bf16.msra.mxu0 0
    %240 = vmatprep.mubr.bf16.mxu0 0
    %241 = vmatmul.mubr.bf16.gmra.mrb[0].mxu0 %v197
    %v242 = vpop.f32.mrb[0].mxu0
    %v243 = vadd.f32 0.0, %v242
    %v244 = vpop.f32.mrb[0].mxu0
    %v245 = vpop.f32.mrb[0].mxu0
    %v246 = vadd.f32 0.0, %v245
    %v247 = vpop.f32.mrb[0].mxu0
    %248 = vmatprep.mubr.bf16.mxu0 0
    %249 = vmatmul.mubr.bf16.gmra.mrb[0].mxu0 %v200
    %v250 = vpop.f32.mrb[0].mxu0
    %v251 = vadd.f32 0.0, %v250
    %v252 = vpop.f32.mrb[0].mxu0
    %v253 = vpop.f32.mrb[0].mxu0
    %v254 = vadd.f32 0.0, %v253
    %v255 = vpop.f32.mrb[0].mxu0
    %256 = vmatprep.mubr.bf16.mxu0 0
    %257 = vmatmul.mubr.bf16.gmra.mrb[0].mxu0 %v203
    %v258 = vpop.f32.mrb[0].mxu0
    %v259 = vadd.f32 0.0, %v258
    %v260 = vpop.f32.mrb[0].mxu0
    %v261 = vpop.f32.mrb[0].mxu0
    %v262 = vadd.f32 0.0, %v261
    %v263 = vpop.f32.mrb[0].mxu0
    %264 = vmatprep.mubr.bf16.mxu0 0
    %265 = vmatmul.mubr.bf16.gmra.mrb[0].mxu0 %v206
    %v266 = vpop.f32.mrb[0].mxu0
    %v267 = vadd.f32 0.0, %v266
    %v268 = vpop.f32.mrb[0].mxu0
    %v269 = vpop.f32.mrb[0].mxu0
    %v270 = vadd.f32 0.0, %v269
    %v271 = vpop.f32.mrb[0].mxu0
    %272 = vdwg.mxu0
    %v281 = vunpack.c.l.b16 %v41
    %v282 = vunpack.c.l.b16 %v42
    %v283 = vunpack.c.l.b16 %v43
    %v284 = vunpack.c.l.b16 %v44
    %v285 = vunpack.c.l.b16 %v45
    %v286 = vunpack.c.l.b16 %v46
    %v287 = vunpack.c.l.b16 %v47
    %v288 = vunpack.c.l.b16 %v48
    %v289 = vpack.c.b16 %v282, %v281
    %v290 = vpack.c.b16 %v284, %v283
    %v291 = vpack.c.b16 %v286, %v285
    %v292 = vpack.c.b16 %v288, %v287
    %v295 = vunpack.c.l.b16 %v49
    %v296 = vunpack.c.l.b16 %v50
    %v297 = vpack.c.b16 %v296, %v295
    %v300 = vsel %vm195, %v289, 0
    %v303 = vsel %vm195, %v290, 0
    %v306 = vsel %vm195, %v291, 0
    %v309 = vsel %vm195, %v292, 0
    %311 = vmatprep.subr.bf16.mxu0 0
    %312 = vmatpush1.bf16.msra.mxu0 %v297
    %313 = vmatprep.subr.bf16.mxu0 0
    %314 = vmatpush1.bf16.msra.mxu0 0
    %315 = vmatprep.subr.bf16.mxu0 0
    %316 = vmatpush1.bf16.msra.mxu0 0
    %317 = vmatprep.subr.bf16.mxu0 0
    %318 = vmatpush1.bf16.msra.mxu0 0
    %319 = vmatprep.subr.bf16.mxu0 0
    %320 = vmatpush1.bf16.msra.mxu0 0
    %321 = vmatprep.subr.bf16.mxu0 0
    %322 = vmatpush1.bf16.msra.mxu0 0
    %323 = vmatprep.subr.bf16.mxu0 0
    %324 = vmatpush1.bf16.msra.mxu0 0
    %325 = vmatprep.subr.bf16.mxu0 0
    %326 = vmatpush1.bf16.msra.mxu0 0
    %327 = vmatprep.subr.bf16.mxu0 0
    %328 = vmatpush1.bf16.msra.mxu0 0
    %329 = vmatprep.subr.bf16.mxu0 0
    %330 = vmatpush1.bf16.msra.mxu0 0
    %331 = vmatprep.subr.bf16.mxu0 0
    %332 = vmatpush1.bf16.msra.mxu0 0
    %333 = vmatprep.subr.bf16.mxu0 0
    %334 = vmatpush1.bf16.msra.mxu0 0
    %335 = vmatprep.subr.bf16.mxu0 0
    %336 = vmatpush1.bf16.msra.mxu0 0
    %337 = vmatprep.subr.bf16.mxu0 0
    %338 = vmatpush1.bf16.msra.mxu0 0
    %339 = vmatprep.subr.bf16.mxu0 0
    %340 = vmatpush1.bf16.msra.mxu0 0
    %341 = vmatprep.subr.bf16.mxu0 0
    %342 = vmatpush1.bf16.msra.mxu0 0
    %343 = vmatprep.mubr.bf16.mxu0 0
    %344 = vmatmul.mubr.bf16.gmra.mrb[0].mxu0 %v300
    %v345 = vpop.f32.mrb[0].mxu0
    %v346 = vadd.f32 %v243, %v345
    %v347 = vpop.f32.mrb[0].mxu0
    %v348 = vpop.f32.mrb[0].mxu0
    %v349 = vadd.f32 %v246, %v348
    %v350 = vpop.f32.mrb[0].mxu0
    %351 = vmatprep.mubr.bf16.mxu0 0
    %352 = vmatmul.mubr.bf16.gmra.mrb[0].mxu0 %v303
    %v353 = vpop.f32.mrb[0].mxu0
    %v354 = vadd.f32 %v251, %v353
    %v355 = vpop.f32.mrb[0].mxu0
    %v356 = vpop.f32.mrb[0].mxu0
    %v357 = vadd.f32 %v254, %v356
    %v358 = vpop.f32.mrb[0].mxu0
    %359 = vmatprep.mubr.bf16.mxu0 0
    %360 = vmatmul.mubr.bf16.gmra.mrb[0].mxu0 %v306
    %v361 = vpop.f32.mrb[0].mxu0
    %v362 = vadd.f32 %v259, %v361
    %v363 = vpop.f32.mrb[0].mxu0
    %v364 = vpop.f32.mrb[0].mxu0
    %v365 = vadd.f32 %v262, %v364
    %v366 = vpop.f32.mrb[0].mxu0
    %367 = vmatprep.mubr.bf16.mxu0 0
    %368 = vmatmul.mubr.bf16.gmra.mrb[0].mxu0 %v309
    %v369 = vpop.f32.mrb[0].mxu0
    %v370 = vadd.f32 %v267, %v369
    %v371 = vpop.f32.mrb[0].mxu0
    %v372 = vpop.f32.mrb[0].mxu0
    %v373 = vadd.f32 %v270, %v372
    %v374 = vpop.f32.mrb[0].mxu0
    %375 = vdwg.mxu0
    %s376 = scalar_lea.vmem [#allocation2], 8
    %v377 = vld [vmem:[%s376] sm:$0xf]
    %v378 = vld [vmem:[%s376 + $0x8] sm:$0xf]
    %v379 = vld [vmem:[%s376 + $0x10] sm:$0xf]
    %v380 = vld [vmem:[%s376 + $0x18] sm:$0xf]
    %v381 = vld [vmem:[%s376 + $0x20] sm:$0xf]
    %v382 = vld [vmem:[%s376 + $0x28] sm:$0xf]
    %v383 = vld [vmem:[%s376 + $0x30] sm:$0xf]
    %v384 = vld [vmem:[%s376 + $0x38] sm:$0xf]
    %s385 = scalar_lea.vmem [#allocation5], 16
    %v386 = vld [vmem:[%s385] sm:$0xf]
    %v387 = vld [vmem:[%s385 + $0x4] sm:$0xf]
    %v396 = vunpack.c.l.b16 %v377
    %v397 = vunpack.c.l.b16 %v378
    %v398 = vunpack.c.l.b16 %v379
    %v399 = vunpack.c.l.b16 %v380
    %v400 = vunpack.c.l.b16 %v381
    %v401 = vunpack.c.l.b16 %v382
    %v402 = vunpack.c.l.b16 %v383
    %v403 = vunpack.c.l.b16 %v384
    %v404 = vpack.c.b16 %v397, %v396
    %v405 = vpack.c.b16 %v399, %v398
    %v406 = vpack.c.b16 %v401, %v400
    %v407 = vpack.c.b16 %v403, %v402
    %v410 = vunpack.c.l.b16 %v386
    %v411 = vunpack.c.l.b16 %v387
    %v412 = vpack.c.b16 %v411, %v410
    %v415 = vsel %vm195, %v404, 0
    %v418 = vsel %vm195, %v405, 0
    %v421 = vsel %vm195, %v406, 0
    %v424 = vsel %vm195, %v407, 0
    %426 = vmatprep.subr.bf16.mxu0 0
    %427 = vmatpush1.bf16.msra.mxu0 %v412
    %428 = vmatprep.subr.bf16.mxu0 0
    %429 = vmatpush1.bf16.msra.mxu0 0
    %430 = vmatprep.subr.bf16.mxu0 0
    %431 = vmatpush1.bf16.msra.mxu0 0
    %432 = vmatprep.subr.bf16.mxu0 0
    %433 = vmatpush1.bf16.msra.mxu0 0
    %434 = vmatprep.subr.bf16.mxu0 0
    %435 = vmatpush1.bf16.msra.mxu0 0
    %436 = vmatprep.subr.bf16.mxu0 0
    %437 = vmatpush1.bf16.msra.mxu0 0
    %438 = vmatprep.subr.bf16.mxu0 0
    %439 = vmatpush1.bf16.msra.mxu0 0
    %440 = vmatprep.subr.bf16.mxu0 0
    %441 = vmatpush1.bf16.msra.mxu0 0
    %442 = vmatprep.subr.bf16.mxu0 0
    %443 = vmatpush1.bf16.msra.mxu0 0
    %444 = vmatprep.subr.bf16.mxu0 0
    %445 = vmatpush1.bf16.msra.mxu0 0
    %446 = vmatprep.subr.bf16.mxu0 0
    %447 = vmatpush1.bf16.msra.mxu0 0
    %448 = vmatprep.subr.bf16.mxu0 0
    %449 = vmatpush1.bf16.msra.mxu0 0
    %450 = vmatprep.subr.bf16.mxu0 0
    %451 = vmatpush1.bf16.msra.mxu0 0
    %452 = vmatprep.subr.bf16.mxu0 0
    %453 = vmatpush1.bf16.msra.mxu0 0
    %454 = vmatprep.subr.bf16.mxu0 0
    %455 = vmatpush1.bf16.msra.mxu0 0
    %456 = vmatprep.subr.bf16.mxu0 0
    %457 = vmatpush1.bf16.msra.mxu0 0
    %458 = vmatprep.mubr.bf16.mxu0 0
    %459 = vmatmul.mubr.bf16.gmra.mrb[0].mxu0 %v415
    %v460 = vpop.f32.mrb[0].mxu0
    %v461 = vadd.f32 0.0, %v460
    %v462 = vpop.f32.mrb[0].mxu0
    %v463 = vpop.f32.mrb[0].mxu0
    %v464 = vadd.f32 0.0, %v463
    %v465 = vpop.f32.mrb[0].mxu0
    %466 = vmatprep.mubr.bf16.mxu0 0
    %467 = vmatmul.mubr.bf16.gmra.mrb[0].mxu0 %v418
    %v468 = vpop.f32.mrb[0].mxu0
    %v469 = vadd.f32 0.0, %v468
    %v470 = vpop.f32.mrb[0].mxu0
    %v471 = vpop.f32.mrb[0].mxu0
    %v472 = vadd.f32 0.0, %v471
    %v473 = vpop.f32.mrb[0].mxu0
    %474 = vmatprep.mubr.bf16.mxu0 0
    %475 = vmatmul.mubr.bf16.gmra.mrb[0].mxu0 %v421
    %v476 = vpop.f32.mrb[0].mxu0
    %v477 = vadd.f32 0.0, %v476
    %v478 = vpop.f32.mrb[0].mxu0
    %v479 = vpop.f32.mrb[0].mxu0
    %v480 = vadd.f32 0.0, %v479
    %v481 = vpop.f32.mrb[0].mxu0
    %482 = vmatprep.mubr.bf16.mxu0 0
    %483 = vmatmul.mubr.bf16.gmra.mrb[0].mxu0 %v424
    %v484 = vpop.f32.mrb[0].mxu0
    %v485 = vadd.f32 0.0, %v484
    %v486 = vpop.f32.mrb[0].mxu0
    %v487 = vpop.f32.mrb[0].mxu0
    %v488 = vadd.f32 0.0, %v487
    %v489 = vpop.f32.mrb[0].mxu0
    %490 = vdwg.mxu0
    %v491 = vadd.f32 %v346, %v461
    %v492 = vadd.f32 %v349, %v464
    %v493 = vadd.f32 %v354, %v469
    %v494 = vadd.f32 %v357, %v472
    %v495 = vadd.f32 %v362, %v477
    %v496 = vadd.f32 %v365, %v480
    %v497 = vadd.f32 %v370, %v485
    %v498 = vadd.f32 %v373, %v488
    %v499 = vld [vmem:[%s376] sm:$0xf]
    %v500 = vld [vmem:[%s376 + $0x4] sm:$0x1]
    %v501 = vld [vmem:[%s376 + $0x8] sm:$0xf]
    %v502 = vld [vmem:[%s376 + $0xc] sm:$0x1]
    %v503 = vld [vmem:[%s376 + $0x10] sm:$0xf]
    %v504 = vld [vmem:[%s376 + $0x14] sm:$0x1]
    %v505 = vld [vmem:[%s376 + $0x18] sm:$0xf]
    %v506 = vld [vmem:[%s376 + $0x1c] sm:$0x1]
    %v507 = vld [vmem:[%s376 + $0x20] sm:$0xf]
    %v508 = vld [vmem:[%s376 + $0x24] sm:$0x1]
    %v509 = vld [vmem:[%s376 + $0x28] sm:$0xf]
    %v510 = vld [vmem:[%s376 + $0x2c] sm:$0x1]
    %v511 = vld [vmem:[%s376 + $0x30] sm:$0xf]
    %v512 = vld [vmem:[%s376 + $0x34] sm:$0x1]
    %v513 = vld [vmem:[%s376 + $0x38] sm:$0xf]
    %v514 = vld [vmem:[%s376 + $0x3c] sm:$0x1]
    %v516 = vshrl.u32 %v499, 16
    %v518 = vrot.slane %v516, 4
    %v519 = vshll.u32 %v499, 16
    %v521 = vrot.slane %v519, 5
    %v522 = vor.u32 %v518, %v521
    %v523 = vrot.slane %v522, 4
    %v525 = vshll.u32 %v500, 16
    %v527 = vrot.slane %v525, 5
    %v528 = vsel %vm61, %v523, %v527
    %v530 = vshrl.u32 %v501, 16
    %v532 = vrot.slane %v530, 4
    %v533 = vshll.u32 %v501, 16
    %v535 = vrot.slane %v533, 5
    %v536 = vor.u32 %v532, %v535
    %v537 = vrot.slane %v536, 4
    %v539 = vshll.u32 %v502, 16
    %v541 = vrot.slane %v539, 5
    %v542 = vsel %vm61, %v537, %v541
    %v544 = vshrl.u32 %v503, 16
    %v546 = vrot.slane %v544, 4
    %v547 = vshll.u32 %v503, 16
    %v549 = vrot.slane %v547, 5
    %v550 = vor.u32 %v546, %v549
    %v551 = vrot.slane %v550, 4
    %v553 = vshll.u32 %v504, 16
    %v555 = vrot.slane %v553, 5
    %v556 = vsel %vm61, %v551, %v555
    %v558 = vshrl.u32 %v505, 16
    %v560 = vrot.slane %v558, 4
    %v561 = vshll.u32 %v505, 16
    %v563 = vrot.slane %v561, 5
    %v564 = vor.u32 %v560, %v563
    %v565 = vrot.slane %v564, 4
    %v567 = vshll.u32 %v506, 16
    %v569 = vrot.slane %v567, 5
    %v570 = vsel %vm61, %v565, %v569
    %v572 = vshrl.u32 %v507, 16
    %v574 = vrot.slane %v572, 4
    %v575 = vshll.u32 %v507, 16
    %v577 = vrot.slane %v575, 5
    %v578 = vor.u32 %v574, %v577
    %v579 = vrot.slane %v578, 4
    %v581 = vshll.u32 %v508, 16
    %v583 = vrot.slane %v581, 5
    %v584 = vsel %vm61, %v579, %v583
    %v586 = vshrl.u32 %v509, 16
    %v588 = vrot.slane %v586, 4
    %v589 = vshll.u32 %v509, 16
    %v591 = vrot.slane %v589, 5
    %v592 = vor.u32 %v588, %v591
    %v593 = vrot.slane %v592, 4
    %v595 = vshll.u32 %v510, 16
    %v597 = vrot.slane %v595, 5
    %v598 = vsel %vm61, %v593, %v597
    %v600 = vshrl.u32 %v511, 16
    %v602 = vrot.slane %v600, 4
    %v603 = vshll.u32 %v511, 16
    %v605 = vrot.slane %v603, 5
    %v606 = vor.u32 %v602, %v605
    %v607 = vrot.slane %v606, 4
    %v609 = vshll.u32 %v512, 16
    %v611 = vrot.slane %v609, 5
    %v612 = vsel %vm61, %v607, %v611
    %v614 = vshrl.u32 %v513, 16
    %v616 = vrot.slane %v614, 4
    %v617 = vshll.u32 %v513, 16
    %v619 = vrot.slane %v617, 5
    %v620 = vor.u32 %v616, %v619
    %v621 = vrot.slane %v620, 4
    %v623 = vshll.u32 %v514, 16
    %v625 = vrot.slane %v623, 5
    %v626 = vsel %vm61, %v621, %v625
    %s627 = scalar_lea.vmem [#allocation5], 24
    %v628 = vld [vmem:[%s627] sm:$0xf]
    %v629 = vld [vmem:[%s627 + $0x4] sm:$0xf]
    %v630 = vunpack.c.l.b16 %v528
    %v631 = vunpack.c.l.b16 %v542
    %v632 = vunpack.c.l.b16 %v556
    %v633 = vunpack.c.l.b16 %v570
    %v634 = vunpack.c.l.b16 %v584
    %v635 = vunpack.c.l.b16 %v598
    %v636 = vunpack.c.l.b16 %v612
    %v637 = vunpack.c.l.b16 %v626
    %v638 = vpack.c.b16 %v631, %v630
    %v639 = vpack.c.b16 %v633, %v632
    %v640 = vpack.c.b16 %v635, %v634
    %v641 = vpack.c.b16 %v637, %v636
    %v644 = vunpack.c.l.b16 %v628
    %v645 = vunpack.c.l.b16 %v629
    %v646 = vpack.c.b16 %v645, %v644
    %v649 = vsel %vm195, %v638, 0
    %v652 = vsel %vm195, %v639, 0
    %v655 = vsel %vm195, %v640, 0
    %v658 = vsel %vm195, %v641, 0
    %660 = vmatprep.subr.bf16.mxu0 0
    %661 = vmatpush1.bf16.msra.mxu0 %v646
    %662 = vmatprep.subr.bf16.mxu0 0
    %663 = vmatpush1.bf16.msra.mxu0 0
    %664 = vmatprep.subr.bf16.mxu0 0
    %665 = vmatpush1.bf16.msra.mxu0 0
    %666 = vmatprep.subr.bf16.mxu0 0
    %667 = vmatpush1.bf16.msra.mxu0 0
    %668 = vmatprep.subr.bf16.mxu0 0
    %669 = vmatpush1.bf16.msra.mxu0 0
    %670 = vmatprep.subr.bf16.mxu0 0
    %671 = vmatpush1.bf16.msra.mxu0 0
    %672 = vmatprep.subr.bf16.mxu0 0
    %673 = vmatpush1.bf16.msra.mxu0 0
    %674 = vmatprep.subr.bf16.mxu0 0
    %675 = vmatpush1.bf16.msra.mxu0 0
    %676 = vmatprep.subr.bf16.mxu0 0
    %677 = vmatpush1.bf16.msra.mxu0 0
    %678 = vmatprep.subr.bf16.mxu0 0
    %679 = vmatpush1.bf16.msra.mxu0 0
    %680 = vmatprep.subr.bf16.mxu0 0
    %681 = vmatpush1.bf16.msra.mxu0 0
    %682 = vmatprep.subr.bf16.mxu0 0
    %683 = vmatpush1.bf16.msra.mxu0 0
    %684 = vmatprep.subr.bf16.mxu0 0
    %685 = vmatpush1.bf16.msra.mxu0 0
    %686 = vmatprep.subr.bf16.mxu0 0
    %687 = vmatpush1.bf16.msra.mxu0 0
    %688 = vmatprep.subr.bf16.mxu0 0
    %689 = vmatpush1.bf16.msra.mxu0 0
    %690 = vmatprep.subr.bf16.mxu0 0
    %691 = vmatpush1.bf16.msra.mxu0 0
    %692 = vmatprep.mubr.bf16.mxu0 0
    %693 = vmatmul.mubr.bf16.gmra.mrb[0].mxu0 %v649
    %v694 = vpop.f32.mrb[0].mxu0
    %v695 = vadd.f32 0.0, %v694
    %v696 = vpop.f32.mrb[0].mxu0
    %v697 = vpop.f32.mrb[0].mxu0
    %v698 = vadd.f32 0.0, %v697
    %v699 = vpop.f32.mrb[0].mxu0
    %700 = vmatprep.mubr.bf16.mxu0 0
    %701 = vmatmul.mubr.bf16.gmra.mrb[0].mxu0 %v652
    %v702 = vpop.f32.mrb[0].mxu0
    %v703 = vadd.f32 0.0, %v702
    %v704 = vpop.f32.mrb[0].mxu0
    %v705 = vpop.f32.mrb[0].mxu0
    %v706 = vadd.f32 0.0, %v705
    %v707 = vpop.f32.mrb[0].mxu0
    %708 = vmatprep.mubr.bf16.mxu0 0
    %709 = vmatmul.mubr.bf16.gmra.mrb[0].mxu0 %v655
    %v710 = vpop.f32.mrb[0].mxu0
    %v711 = vadd.f32 0.0, %v710
    %v712 = vpop.f32.mrb[0].mxu0
    %v713 = vpop.f32.mrb[0].mxu0
    %v714 = vadd.f32 0.0, %v713
    %v715 = vpop.f32.mrb[0].mxu0
    %716 = vmatprep.mubr.bf16.mxu0 0
    %717 = vmatmul.mubr.bf16.gmra.mrb[0].mxu0 %v658
    %v718 = vpop.f32.mrb[0].mxu0
    %v719 = vadd.f32 0.0, %v718
    %v720 = vpop.f32.mrb[0].mxu0
    %v721 = vpop.f32.mrb[0].mxu0
    %v722 = vadd.f32 0.0, %v721
    %v723 = vpop.f32.mrb[0].mxu0
    %724 = vdwg.mxu0
    %v725 = vadd.f32 %v491, %v695
    %v726 = vadd.f32 %v492, %v698
    %v727 = vadd.f32 %v493, %v703
    %v728 = vadd.f32 %v494, %v706
    %v729 = vadd.f32 %v495, %v711
    %v730 = vadd.f32 %v496, %v714
    %v731 = vadd.f32 %v497, %v719
    %v732 = vadd.f32 %v498, %v722
    %s733 = scalar_lea.vmem [#allocation2], 72
    %v734 = vld [vmem:[%s733] sm:$0xf]
    %v735 = vld [vmem:[%s733 + $0x8] sm:$0xf]
    %v736 = vld [vmem:[%s733 + $0x10] sm:$0xf]
    %v737 = vld [vmem:[%s733 + $0x18] sm:$0xf]
    %v738 = vld [vmem:[%s733 + $0x20] sm:$0xf]
    %v739 = vld [vmem:[%s733 + $0x28] sm:$0xf]
    %v740 = vld [vmem:[%s733 + $0x30] sm:$0xf]
    %v741 = vld [vmem:[%s733 + $0x38] sm:$0xf]
    %v742 = vld [vmem:[%s733 + $0x4] sm:$0x1]
    %v743 = vld [vmem:[%s733 + $0xc] sm:$0x1]
    %v744 = vld [vmem:[%s733 + $0x14] sm:$0x1]
    %v745 = vld [vmem:[%s733 + $0x1c] sm:$0x1]
    %v746 = vld [vmem:[%s733 + $0x24] sm:$0x1]
    %v747 = vld [vmem:[%s733 + $0x2c] sm:$0x1]
    %v748 = vld [vmem:[%s733 + $0x34] sm:$0x1]
    %v749 = vld [vmem:[%s733 + $0x3c] sm:$0x1]
    %v751 = vshrl.u32 %v734, 16
    %v753 = vrot.slane %v751, 4
    %v754 = vshll.u32 %v734, 16
    %v756 = vrot.slane %v754, 5
    %v757 = vor.u32 %v753, %v756
    %v758 = vrot.slane %v757, 4
    %v760 = vshll.u32 %v742, 16
    %v762 = vrot.slane %v760, 5
    %v763 = vsel %vm61, %v758, %v762
    %v765 = vshrl.u32 %v735, 16
    %v767 = vrot.slane %v765, 4
    %v768 = vshll.u32 %v735, 16
    %v770 = vrot.slane %v768, 5
    %v771 = vor.u32 %v767, %v770
    %v772 = vrot.slane %v771, 4
    %v774 = vshll.u32 %v743, 16
    %v776 = vrot.slane %v774, 5
    %v777 = vsel %vm61, %v772, %v776
    %v779 = vshrl.u32 %v736, 16
    %v781 = vrot.slane %v779, 4
    %v782 = vshll.u32 %v736, 16
    %v784 = vrot.slane %v782, 5
    %v785 = vor.u32 %v781, %v784
    %v786 = vrot.slane %v785, 4
    %v788 = vshll.u32 %v744, 16
    %v790 = vrot.slane %v788, 5
    %v791 = vsel %vm61, %v786, %v790
    %v793 = vshrl.u32 %v737, 16
    %v795 = vrot.slane %v793, 4
    %v796 = vshll.u32 %v737, 16
    %v798 = vrot.slane %v796, 5
    %v799 = vor.u32 %v795, %v798
    %v800 = vrot.slane %v799, 4
    %v802 = vshll.u32 %v745, 16
    %v804 = vrot.slane %v802, 5
    %v805 = vsel %vm61, %v800, %v804
    %v807 = vshrl.u32 %v738, 16
    %v809 = vrot.slane %v807, 4
    %v810 = vshll.u32 %v738, 16
    %v812 = vrot.slane %v810, 5
    %v813 = vor.u32 %v809, %v812
    %v814 = vrot.slane %v813, 4
    %v816 = vshll.u32 %v746, 16
    %v818 = vrot.slane %v816, 5
    %v819 = vsel %vm61, %v814, %v818
    %v821 = vshrl.u32 %v739, 16
    %v823 = vrot.slane %v821, 4
    %v824 = vshll.u32 %v739, 16
    %v826 = vrot.slane %v824, 5
    %v827 = vor.u32 %v823, %v826
    %v828 = vrot.slane %v827, 4
    %v830 = vshll.u32 %v747, 16
    %v832 = vrot.slane %v830, 5
    %v833 = vsel %vm61, %v828, %v832
    %v835 = vshrl.u32 %v740, 16
    %v837 = vrot.slane %v835, 4
    %v838 = vshll.u32 %v740, 16
    %v840 = vrot.slane %v838, 5
    %v841 = vor.u32 %v837, %v840
    %v842 = vrot.slane %v841, 4
    %v844 = vshll.u32 %v748, 16
    %v846 = vrot.slane %v844, 5
    %v847 = vsel %vm61, %v842, %v846
    %v849 = vshrl.u32 %v741, 16
    %v851 = vrot.slane %v849, 4
    %v852 = vshll.u32 %v741, 16
    %v854 = vrot.slane %v852, 5
    %v855 = vor.u32 %v851, %v854
    %v856 = vrot.slane %v855, 4
    %v858 = vshll.u32 %v749, 16
    %v860 = vrot.slane %v858, 5
    %v861 = vsel %vm61, %v856, %v860
    %v862 = vunpack.c.l.b16 %v763
    %v863 = vunpack.c.l.b16 %v777
    %v864 = vunpack.c.l.b16 %v791
    %v865 = vunpack.c.l.b16 %v805
    %v866 = vunpack.c.l.b16 %v819
    %v867 = vunpack.c.l.b16 %v833
    %v868 = vunpack.c.l.b16 %v847
    %v869 = vunpack.c.l.b16 %v861
    %v870 = vpack.c.b16 %v863, %v862
    %v871 = vpack.c.b16 %v865, %v864
    %v872 = vpack.c.b16 %v867, %v866
    %v873 = vpack.c.b16 %v869, %v868
    %v875 = vsel %vm195, %v870, 0
    %v878 = vsel %vm195, %v871, 0
    %v881 = vsel %vm195, %v872, 0
    %v884 = vsel %vm195, %v873, 0
    %886 = vmatprep.subr.bf16.mxu0 0
    %887 = vmatpush1.bf16.msra.mxu0 %v193
    %888 = vmatprep.subr.bf16.mxu0 0
    %889 = vmatpush1.bf16.msra.mxu0 0
    %890 = vmatprep.subr.bf16.mxu0 0
    %891 = vmatpush1.bf16.msra.mxu0 0
    %892 = vmatprep.subr.bf16.mxu0 0
    %893 = vmatpush1.bf16.msra.mxu0 0
    %894 = vmatprep.subr.bf16.mxu0 0
    %895 = vmatpush1.bf16.msra.mxu0 0
    %896 = vmatprep.subr.bf16.mxu0 0
    %897 = vmatpush1.bf16.msra.mxu0 0
    %898 = vmatprep.subr.bf16.mxu0 0
    %899 = vmatpush1.bf16.msra.mxu0 0
    %900 = vmatprep.subr.bf16.mxu0 0
    %901 = vmatpush1.bf16.msra.mxu0 0
    %902 = vmatprep.subr.bf16.mxu0 0
    %903 = vmatpush1.bf16.msra.mxu0 0
    %904 = vmatprep.subr.bf16.mxu0 0
    %905 = vmatpush1.bf16.msra.mxu0 0
    %906 = vmatprep.subr.bf16.mxu0 0
    %907 = vmatpush1.bf16.msra.mxu0 0
    %908 = vmatprep.subr.bf16.mxu0 0
    %909 = vmatpush1.bf16.msra.mxu0 0
    %910 = vmatprep.subr.bf16.mxu0 0
    %911 = vmatpush1.bf16.msra.mxu0 0
    %912 = vmatprep.subr.bf16.mxu0 0
    %913 = vmatpush1.bf16.msra.mxu0 0
    %914 = vmatprep.subr.bf16.mxu0 0
    %915 = vmatpush1.bf16.msra.mxu0 0
    %916 = vmatprep.subr.bf16.mxu0 0
    %917 = vmatpush1.bf16.msra.mxu0 0
    %918 = vmatprep.mubr.bf16.mxu0 0
    %919 = vmatmul.mubr.bf16.gmra.mrb[0].mxu0 %v875
    %v920 = vpop.f32.mrb[0].mxu0
    %v921 = vadd.f32 0.0, %v920
    %v922 = vpop.f32.mrb[0].mxu0
    %v923 = vpop.f32.mrb[0].mxu0
    %v924 = vadd.f32 0.0, %v923
    %v925 = vpop.f32.mrb[0].mxu0
    %926 = vmatprep.mubr.bf16.mxu0 0
    %927 = vmatmul.mubr.bf16.gmra.mrb[0].mxu0 %v878
    %v928 = vpop.f32.mrb[0].mxu0
    %v929 = vadd.f32 0.0, %v928
    %v930 = vpop.f32.mrb[0].mxu0
    %v931 = vpop.f32.mrb[0].mxu0
    %v932 = vadd.f32 0.0, %v931
    %v933 = vpop.f32.mrb[0].mxu0
    %934 = vmatprep.mubr.bf16.mxu0 0
    %935 = vmatmul.mubr.bf16.gmra.mrb[0].mxu0 %v881
    %v936 = vpop.f32.mrb[0].mxu0
    %v937 = vadd.f32 0.0, %v936
    %v938 = vpop.f32.mrb[0].mxu0
    %v939 = vpop.f32.mrb[0].mxu0
    %v940 = vadd.f32 0.0, %v939
    %v941 = vpop.f32.mrb[0].mxu0
    %942 = vmatprep.mubr.bf16.mxu0 0
    %943 = vmatmul.mubr.bf16.gmra.mrb[0].mxu0 %v884
    %v944 = vpop.f32.mrb[0].mxu0
    %v945 = vadd.f32 0.0, %v944
    %v946 = vpop.f32.mrb[0].mxu0
    %v947 = vpop.f32.mrb[0].mxu0
    %v948 = vadd.f32 0.0, %v947
    %v949 = vpop.f32.mrb[0].mxu0
    %950 = vdwg.mxu0
    %v959 = vunpack.c.l.b16 %v734
    %v960 = vunpack.c.l.b16 %v735
    %v961 = vunpack.c.l.b16 %v736
    %v962 = vunpack.c.l.b16 %v737
    %v963 = vunpack.c.l.b16 %v738
    %v964 = vunpack.c.l.b16 %v739
    %v965 = vunpack.c.l.b16 %v740
    %v966 = vunpack.c.l.b16 %v741
    %v967 = vpack.c.b16 %v960, %v959
    %v968 = vpack.c.b16 %v962, %v961
    %v969 = vpack.c.b16 %v964, %v963
    %v970 = vpack.c.b16 %v966, %v965
    %v972 = vsel %vm195, %v967, 0
    %v975 = vsel %vm195, %v968, 0
    %v978 = vsel %vm195, %v969, 0
    %v981 = vsel %vm195, %v970, 0
    %983 = vmatprep.subr.bf16.mxu0 0
    %984 = vmatpush1.bf16.msra.mxu0 %v297
    %985 = vmatprep.subr.bf16.mxu0 0
    %986 = vmatpush1.bf16.msra.mxu0 0
    %987 = vmatprep.subr.bf16.mxu0 0
    %988 = vmatpush1.bf16.msra.mxu0 0
    %989 = vmatprep.subr.bf16.mxu0 0
    %990 = vmatpush1.bf16.msra.mxu0 0
    %991 = vmatprep.subr.bf16.mxu0 0
    %992 = vmatpush1.bf16.msra.mxu0 0
    %993 = vmatprep.subr.bf16.mxu0 0
    %994 = vmatpush1.bf16.msra.mxu0 0
    %995 = vmatprep.subr.bf16.mxu0 0
    %996 = vmatpush1.bf16.msra.mxu0 0
    %997 = vmatprep.subr.bf16.mxu0 0
    %998 = vmatpush1.bf16.msra.mxu0 0
    %999 = vmatprep.subr.bf16.mxu0 0
    %1000 = vmatpush1.bf16.msra.mxu0 0
    %1001 = vmatprep.subr.bf16.mxu0 0
    %1002 = vmatpush1.bf16.msra.mxu0 0
    %1003 = vmatprep.subr.bf16.mxu0 0
    %1004 = vmatpush1.bf16.msra.mxu0 0
    %1005 = vmatprep.subr.bf16.mxu0 0
    %1006 = vmatpush1.bf16.msra.mxu0 0
    %1007 = vmatprep.subr.bf16.mxu0 0
    %1008 = vmatpush1.bf16.msra.mxu0 0
    %1009 = vmatprep.subr.bf16.mxu0 0
    %1010 = vmatpush1.bf16.msra.mxu0 0
    %1011 = vmatprep.subr.bf16.mxu0 0
    %1012 = vmatpush1.bf16.msra.mxu0 0
    %1013 = vmatprep.subr.bf16.mxu0 0
    %1014 = vmatpush1.bf16.msra.mxu0 0
    %1015 = vmatprep.mubr.bf16.mxu0 0
    %1016 = vmatmul.mubr.bf16.gmra.mrb[0].mxu0 %v972
    %v1017 = vpop.f32.mrb[0].mxu0
    %v1018 = vadd.f32 %v921, %v1017
    %v1019 = vpop.f32.mrb[0].mxu0
    %v1020 = vpop.f32.mrb[0].mxu0
    %v1021 = vadd.f32 %v924, %v1020
    %v1022 = vpop.f32.mrb[0].mxu0
    %1023 = vmatprep.mubr.bf16.mxu0 0
    %1024 = vmatmul.mubr.bf16.gmra.mrb[0].mxu0 %v975
    %v1025 = vpop.f32.mrb[0].mxu0
    %v1026 = vadd.f32 %v929, %v1025
    %v1027 = vpop.f32.mrb[0].mxu0
    %v1028 = vpop.f32.mrb[0].mxu0
    %v1029 = vadd.f32 %v932, %v1028
    %v1030 = vpop.f32.mrb[0].mxu0
    %1031 = vmatprep.mubr.bf16.mxu0 0
    %1032 = vmatmul.mubr.bf16.gmra.mrb[0].mxu0 %v978
    %v1033 = vpop.f32.mrb[0].mxu0
    %v1034 = vadd.f32 %v937, %v1033
    %v1035 = vpop.f32.mrb[0].mxu0
    %v1036 = vpop.f32.mrb[0].mxu0
    %v1037 = vadd.f32 %v940, %v1036
    %v1038 = vpop.f32.mrb[0].mxu0
    %1039 = vmatprep.mubr.bf16.mxu0 0
    %1040 = vmatmul.mubr.bf16.gmra.mrb[0].mxu0 %v981
    %v1041 = vpop.f32.mrb[0].mxu0
    %v1042 = vadd.f32 %v945, %v1041
    %v1043 = vpop.f32.mrb[0].mxu0
    %v1044 = vpop.f32.mrb[0].mxu0
    %v1045 = vadd.f32 %v948, %v1044
    %v1046 = vpop.f32.mrb[0].mxu0
    %1047 = vdwg.mxu0
    %s1048 = scalar_lea.vmem [#allocation2], 80
    %v1049 = vld [vmem:[%s1048] sm:$0xf]
    %v1050 = vld [vmem:[%s1048 + $0x8] sm:$0xf]
    %v1051 = vld [vmem:[%s1048 + $0x10] sm:$0xf]
    %v1052 = vld [vmem:[%s1048 + $0x18] sm:$0xf]
    %v1053 = vld [vmem:[%s1048 + $0x20] sm:$0xf]
    %v1054 = vld [vmem:[%s1048 + $0x28] sm:$0xf]
    %v1055 = vld [vmem:[%s1048 + $0x30] sm:$0xf]
    %v1056 = vld [vmem:[%s1048 + $0x38] sm:$0xf]
    %v1065 = vunpack.c.l.b16 %v1049
    %v1066 = vunpack.c.l.b16 %v1050
    %v1067 = vunpack.c.l.b16 %v1051
    %v1068 = vunpack.c.l.b16 %v1052
    %v1069 = vunpack.c.l.b16 %v1053
    %v1070 = vunpack.c.l.b16 %v1054
    %v1071 = vunpack.c.l.b16 %v1055
    %v1072 = vunpack.c.l.b16 %v1056
    %v1073 = vpack.c.b16 %v1066, %v1065
    %v1074 = vpack.c.b16 %v1068, %v1067
    %v1075 = vpack.c.b16 %v1070, %v1069
    %v1076 = vpack.c.b16 %v1072, %v1071
    %v1078 = vsel %vm195, %v1073, 0
    %v1081 = vsel %vm195, %v1074, 0
    %v1084 = vsel %vm195, %v1075, 0
    %v1087 = vsel %vm195, %v1076, 0
    %1089 = vmatprep.subr.bf16.mxu0 0
    %1090 = vmatpush1.bf16.msra.mxu0 %v412
    %1091 = vmatprep.subr.bf16.mxu0 0
    %1092 = vmatpush1.bf16.msra.mxu0 0
    %1093 = vmatprep.subr.bf16.mxu0 0
    %1094 = vmatpush1.bf16.msra.mxu0 0
    %1095 = vmatprep.subr.bf16.mxu0 0
    %1096 = vmatpush1.bf16.msra.mxu0 0
    %1097 = vmatprep.subr.bf16.mxu0 0
    %1098 = vmatpush1.bf16.msra.mxu0 0
    %1099 = vmatprep.subr.bf16.mxu0 0
    %1100 = vmatpush1.bf16.msra.mxu0 0
    %1101 = vmatprep.subr.bf16.mxu0 0
    %1102 = vmatpush1.bf16.msra.mxu0 0
    %1103 = vmatprep.subr.bf16.mxu0 0
    %1104 = vmatpush1.bf16.msra.mxu0 0
    %1105 = vmatprep.subr.bf16.mxu0 0
    %1106 = vmatpush1.bf16.msra.mxu0 0
    %1107 = vmatprep.subr.bf16.mxu0 0
    %1108 = vmatpush1.bf16.msra.mxu0 0
    %1109 = vmatprep.subr.bf16.mxu0 0
    %1110 = vmatpush1.bf16.msra.mxu0 0
    %1111 = vmatprep.subr.bf16.mxu0 0
    %1112 = vmatpush1.bf16.msra.mxu0 0
    %1113 = vmatprep.subr.bf16.mxu0 0
    %1114 = vmatpush1.bf16.msra.mxu0 0
    %1115 = vmatprep.subr.bf16.mxu0 0
    %1116 = vmatpush1.bf16.msra.mxu0 0
    %1117 = vmatprep.subr.bf16.mxu0 0
    %1118 = vmatpush1.bf16.msra.mxu0 0
    %1119 = vmatprep.subr.bf16.mxu0 0
    %1120 = vmatpush1.bf16.msra.mxu0 0
    %1121 = vmatprep.mubr.bf16.mxu0 0
    %1122 = vmatmul.mubr.bf16.gmra.mrb[0].mxu0 %v1078
    %v1123 = vpop.f32.mrb[0].mxu0
    %v1124 = vadd.f32 0.0, %v1123
    %v1125 = vpop.f32.mrb[0].mxu0
    %v1126 = vpop.f32.mrb[0].mxu0
    %v1127 = vadd.f32 0.0, %v1126
    %v1128 = vpop.f32.mrb[0].mxu0
    %1129 = vmatprep.mubr.bf16.mxu0 0
    %1130 = vmatmul.mubr.bf16.gmra.mrb[0].mxu0 %v1081
    %v1131 = vpop.f32.mrb[0].mxu0
    %v1132 = vadd.f32 0.0, %v1131
    %v1133 = vpop.f32.mrb[0].mxu0
    %v1134 = vpop.f32.mrb[0].mxu0
    %v1135 = vadd.f32 0.0, %v1134
    %v1136 = vpop.f32.mrb[0].mxu0
    %1137 = vmatprep.mubr.bf16.mxu0 0
    %1138 = vmatmul.mubr.bf16.gmra.mrb[0].mxu0 %v1084
    %v1139 = vpop.f32.mrb[0].mxu0
    %v1140 = vadd.f32 0.0, %v1139
    %v1141 = vpop.f32.mrb[0].mxu0
    %v1142 = vpop.f32.mrb[0].mxu0
    %v1143 = vadd.f32 0.0, %v1142
    %v1144 = vpop.f32.mrb[0].mxu0
    %1145 = vmatprep.mubr.bf16.mxu0 0
    %1146 = vmatmul.mubr.bf16.gmra.mrb[0].mxu0 %v1087
    %v1147 = vpop.f32.mrb[0].mxu0
    %v1148 = vadd.f32 0.0, %v1147
    %v1149 = vpop.f32.mrb[0].mxu0
    %v1150 = vpop.f32.mrb[0].mxu0
    %v1151 = vadd.f32 0.0, %v1150
    %v1152 = vpop.f32.mrb[0].mxu0
    %1153 = vdwg.mxu0
    %v1154 = vadd.f32 %v1018, %v1124
    %v1155 = vadd.f32 %v1021, %v1127
    %v1156 = vadd.f32 %v1026, %v1132
    %v1157 = vadd.f32 %v1029, %v1135
    %v1158 = vadd.f32 %v1034, %v1140
    %v1159 = vadd.f32 %v1037, %v1143
    %v1160 = vadd.f32 %v1042, %v1148
    %v1161 = vadd.f32 %v1045, %v1151
    %v1162 = vld [vmem:[%s1048] sm:$0xf]
    %v1163 = vld [vmem:[%s1048 + $0x4] sm:$0x1]
    %v1164 = vld [vmem:[%s1048 + $0x8] sm:$0xf]
    %v1165 = vld [vmem:[%s1048 + $0xc] sm:$0x1]
    %v1166 = vld [vmem:[%s1048 + $0x10] sm:$0xf]
    %v1167 = vld [vmem:[%s1048 + $0x14] sm:$0x1]
    %v1168 = vld [vmem:[%s1048 + $0x18] sm:$0xf]
    %v1169 = vld [vmem:[%s1048 + $0x1c] sm:$0x1]
    %v1170 = vld [vmem:[%s1048 + $0x20] sm:$0xf]
    %v1171 = vld [vmem:[%s1048 + $0x24] sm:$0x1]
    %v1172 = vld [vmem:[%s1048 + $0x28] sm:$0xf]
    %v1173 = vld [vmem:[%s1048 + $0x2c] sm:$0x1]
    %v1174 = vld [vmem:[%s1048 + $0x30] sm:$0xf]
    %v1175 = vld [vmem:[%s1048 + $0x34] sm:$0x1]
    %v1176 = vld [vmem:[%s1048 + $0x38] sm:$0xf]
    %v1177 = vld [vmem:[%s1048 + $0x3c] sm:$0x1]
    %v1179 = vshrl.u32 %v1162, 16
    %v1181 = vrot.slane %v1179, 4
    %v1182 = vshll.u32 %v1162, 16
    %v1184 = vrot.slane %v1182, 5
    %v1185 = vor.u32 %v1181, %v1184
    %v1186 = vrot.slane %v1185, 4
    %v1188 = vshll.u32 %v1163, 16
    %v1190 = vrot.slane %v1188, 5
    %v1191 = vsel %vm61, %v1186, %v1190
    %v1193 = vshrl.u32 %v1164, 16
    %v1195 = vrot.slane %v1193, 4
    %v1196 = vshll.u32 %v1164, 16
    %v1198 = vrot.slane %v1196, 5
    %v1199 = vor.u32 %v1195, %v1198
    %v1200 = vrot.slane %v1199, 4
    %v1202 = vshll.u32 %v1165, 16
    %v1204 = vrot.slane %v1202, 5
    %v1205 = vsel %vm61, %v1200, %v1204
    %v1207 = vshrl.u32 %v1166, 16
    %v1209 = vrot.slane %v1207, 4
    %v1210 = vshll.u32 %v1166, 16
    %v1212 = vrot.slane %v1210, 5
    %v1213 = vor.u32 %v1209, %v1212
    %v1214 = vrot.slane %v1213, 4
    %v1216 = vshll.u32 %v1167, 16
    %v1218 = vrot.slane %v1216, 5
    %v1219 = vsel %vm61, %v1214, %v1218
    %v1221 = vshrl.u32 %v1168, 16
    %v1223 = vrot.slane %v1221, 4
    %v1224 = vshll.u32 %v1168, 16
    %v1226 = vrot.slane %v1224, 5
    %v1227 = vor.u32 %v1223, %v1226
    %v1228 = vrot.slane %v1227, 4
    %v1230 = vshll.u32 %v1169, 16
    %v1232 = vrot.slane %v1230, 5
    %v1233 = vsel %vm61, %v1228, %v1232
    %v1235 = vshrl.u32 %v1170, 16
    %v1237 = vrot.slane %v1235, 4
    %v1238 = vshll.u32 %v1170, 16
    %v1240 = vrot.slane %v1238, 5
    %v1241 = vor.u32 %v1237, %v1240
    %v1242 = vrot.slane %v1241, 4
    %v1244 = vshll.u32 %v1171, 16
    %v1246 = vrot.slane %v1244, 5
    %v1247 = vsel %vm61, %v1242, %v1246
    %v1249 = vshrl.u32 %v1172, 16
    %v1251 = vrot.slane %v1249, 4
    %v1252 = vshll.u32 %v1172, 16
    %v1254 = vrot.slane %v1252, 5
    %v1255 = vor.u32 %v1251, %v1254
    %v1256 = vrot.slane %v1255, 4
    %v1258 = vshll.u32 %v1173, 16
    %v1260 = vrot.slane %v1258, 5
    %v1261 = vsel %vm61, %v1256, %v1260
    %v1263 = vshrl.u32 %v1174, 16
    %v1265 = vrot.slane %v1263, 4
    %v1266 = vshll.u32 %v1174, 16
    %v1268 = vrot.slane %v1266, 5
    %v1269 = vor.u32 %v1265, %v1268
    %v1270 = vrot.slane %v1269, 4
    %v1272 = vshll.u32 %v1175, 16
    %v1274 = vrot.slane %v1272, 5
    %v1275 = vsel %vm61, %v1270, %v1274
    %v1277 = vshrl.u32 %v1176, 16
    %v1279 = vrot.slane %v1277, 4
    %v1280 = vshll.u32 %v1176, 16
    %v1282 = vrot.slane %v1280, 5
    %v1283 = vor.u32 %v1279, %v1282
    %v1284 = vrot.slane %v1283, 4
    %v1286 = vshll.u32 %v1177, 16
    %v1288 = vrot.slane %v1286, 5
    %v1289 = vsel %vm61, %v1284, %v1288
    %v1290 = vunpack.c.l.b16 %v1191
    %v1291 = vunpack.c.l.b16 %v1205
    %v1292 = vunpack.c.l.b16 %v1219
    %v1293 = vunpack.c.l.b16 %v1233
    %v1294 = vunpack.c.l.b16 %v1247
    %v1295 = vunpack.c.l.b16 %v1261
    %v1296 = vunpack.c.l.b16 %v1275
    %v1297 = vunpack.c.l.b16 %v1289
    %v1298 = vpack.c.b16 %v1291, %v1290
    %v1299 = vpack.c.b16 %v1293, %v1292
    %v1300 = vpack.c.b16 %v1295, %v1294
    %v1301 = vpack.c.b16 %v1297, %v1296
    %v1303 = vsel %vm195, %v1298, 0
    %v1306 = vsel %vm195, %v1299, 0
    %v1309 = vsel %vm195, %v1300, 0
    %v1312 = vsel %vm195, %v1301, 0
    %1314 = vmatprep.subr.bf16.mxu0 0
    %1315 = vmatpush1.bf16.msra.mxu0 %v646
    %1316 = vmatprep.subr.bf16.mxu0 0
    %1317 = vmatpush1.bf16.msra.mxu0 0
    %1318 = vmatprep.subr.bf16.mxu0 0
    %1319 = vmatpush1.bf16.msra.mxu0 0
    %1320 = vmatprep.subr.bf16.mxu0 0
    %1321 = vmatpush1.bf16.msra.mxu0 0
    %1322 = vmatprep.subr.bf16.mxu0 0
    %1323 = vmatpush1.bf16.msra.mxu0 0
    %1324 = vmatprep.subr.bf16.mxu0 0
    %1325 = vmatpush1.bf16.msra.mxu0 0
    %1326 = vmatprep.subr.bf16.mxu0 0
    %1327 = vmatpush1.bf16.msra.mxu0 0
    %1328 = vmatprep.subr.bf16.mxu0 0
    %1329 = vmatpush1.bf16.msra.mxu0 0
    %1330 = vmatprep.subr.bf16.mxu0 0
    %1331 = vmatpush1.bf16.msra.mxu0 0
    %1332 = vmatprep.subr.bf16.mxu0 0
    %1333 = vmatpush1.bf16.msra.mxu0 0
    %1334 = vmatprep.subr.bf16.mxu0 0
    %1335 = vmatpush1.bf16.msra.mxu0 0
    %1336 = vmatprep.subr.bf16.mxu0 0
    %1337 = vmatpush1.bf16.msra.mxu0 0
    %1338 = vmatprep.subr.bf16.mxu0 0
    %1339 = vmatpush1.bf16.msra.mxu0 0
    %1340 = vmatprep.subr.bf16.mxu0 0
    %1341 = vmatpush1.bf16.msra.mxu0 0
    %1342 = vmatprep.subr.bf16.mxu0 0
    %1343 = vmatpush1.bf16.msra.mxu0 0
    %1344 = vmatprep.subr.bf16.mxu0 0
    %1345 = vmatpush1.bf16.msra.mxu0 0
    %1346 = vmatprep.mubr.bf16.mxu0 0
    %1347 = vmatmul.mubr.bf16.gmra.mrb[0].mxu0 %v1303
    %v1348 = vpop.f32.mrb[0].mxu0
    %v1349 = vadd.f32 0.0, %v1348
    %v1350 = vpop.f32.mrb[0].mxu0
    %v1351 = vpop.f32.mrb[0].mxu0
    %v1352 = vadd.f32 0.0, %v1351
    %v1353 = vpop.f32.mrb[0].mxu0
    %1354 = vmatprep.mubr.bf16.mxu0 0
    %1355 = vmatmul.mubr.bf16.gmra.mrb[0].mxu0 %v1306
    %v1356 = vpop.f32.mrb[0].mxu0
    %v1357 = vadd.f32 0.0, %v1356
    %v1358 = vpop.f32.mrb[0].mxu0
    %v1359 = vpop.f32.mrb[0].mxu0
    %v1360 = vadd.f32 0.0, %v1359
    %v1361 = vpop.f32.mrb[0].mxu0
    %1362 = vmatprep.mubr.bf16.mxu0 0
    %1363 = vmatmul.mubr.bf16.gmra.mrb[0].mxu0 %v1309
    %v1364 = vpop.f32.mrb[0].mxu0
    %v1365 = vadd.f32 0.0, %v1364
    %v1366 = vpop.f32.mrb[0].mxu0
    %v1367 = vpop.f32.mrb[0].mxu0
    %v1368 = vadd.f32 0.0, %v1367
    %v1369 = vpop.f32.mrb[0].mxu0
    %1370 = vmatprep.mubr.bf16.mxu0 0
    %1371 = vmatmul.mubr.bf16.gmra.mrb[0].mxu0 %v1312
    %v1372 = vpop.f32.mrb[0].mxu0
    %v1373 = vadd.f32 0.0, %v1372
    %v1374 = vpop.f32.mrb[0].mxu0
    %v1375 = vpop.f32.mrb[0].mxu0
    %v1376 = vadd.f32 0.0, %v1375
    %v1377 = vpop.f32.mrb[0].mxu0
    %1378 = vdwg.mxu0
    %v1379 = vadd.f32 %v1154, %v1349
    %v1380 = vadd.f32 %v1155, %v1352
    %v1381 = vadd.f32 %v1156, %v1357
    %v1382 = vadd.f32 %v1157, %v1360
    %v1383 = vadd.f32 %v1158, %v1365
    %v1384 = vadd.f32 %v1159, %v1368
    %v1385 = vadd.f32 %v1160, %v1373
    %v1386 = vadd.f32 %v1161, %v1376
    %1395 = vrot.lane.b32.xlu0 %v1379, 8
    %v1396 = vpop.permute.xlu0 %1395
    %1397 = vrot.lane.b32.xlu0 %v1380, 8
    %v1398 = vpop.permute.xlu0 %1397
    %1399 = vrot.lane.b32.xlu0 %v1381, 8
    %v1400 = vpop.permute.xlu0 %1399
    %1401 = vrot.lane.b32.xlu0 %v1382, 8
    %v1402 = vpop.permute.xlu0 %1401
    %1403 = vrot.lane.b32.xlu0 %v1383, 8
    %v1404 = vpop.permute.xlu0 %1403
    %1405 = vrot.lane.b32.xlu0 %v1384, 8
    %v1406 = vpop.permute.xlu0 %1405
    %1407 = vrot.lane.b32.xlu0 %v1385, 8
    %v1408 = vpop.permute.xlu0 %1407
    %1409 = vrot.lane.b32.xlu0 %v1386, 8
    %v1410 = vpop.permute.xlu0 %1409
    %vm1419 = vcmask 64512
    %v1420 = vsel %vm1419, %v725, %v1396
    %v1421 = vsel %vm1419, %v726, %v1398
    %v1422 = vsel %vm1419, %v727, %v1400
    %v1423 = vsel %vm1419, %v728, %v1402
    %v1424 = vsel %vm1419, %v729, %v1404
    %v1425 = vsel %vm1419, %v730, %v1406
    %v1426 = vsel %vm1419, %v731, %v1408
    %v1427 = vsel %vm1419, %v732, %v1410
    %v1428 = vsel %vm195, %v1420, 0.0
    %v1429 = vsel %vm195, %v1421, 0.0
    %v1430 = vadd.f32 %v1428, %v1429
    %v1431 = vsel %vm195, %v1422, 0.0
    %v1432 = vadd.f32 %v1430, %v1431
    %v1433 = vsel %vm195, %v1423, 0.0
    %v1434 = vadd.f32 %v1432, %v1433
    %v1435 = vsel %vm195, %v1424, 0.0
    %v1436 = vadd.f32 %v1434, %v1435
    %v1437 = vsel %vm195, %v1425, 0.0
    %v1438 = vadd.f32 %v1436, %v1437
    %v1439 = vsel %vm195, %v1426, 0.0
    %v1440 = vadd.f32 %v1438, %v1439
    %v1441 = vsel %vm195, %v1427, 0.0
    %v1442 = vadd.f32 %v1440, %v1441
    %v1443 = vrot.slane %v1442, 4
    %v1444 = vadd.f32 %v1442, %v1443
    %v1445 = vrot.slane %v1444, 2
    %v1446 = vadd.f32 %v1444, %v1445
    %v1447 = vrot.slane %v1446, 1
    %v1448 = vadd.f32 %v1446, %v1447
    %v1449 = vrcp.pop 64.0
    %v1450 = vmul.f32 %v1448, %v1449
    %v1451 = vmul.f32 %v1420, %v1420
    %v1452 = vmul.f32 %v1421, %v1421
    %v1453 = vmul.f32 %v1422, %v1422
    %v1454 = vmul.f32 %v1423, %v1423
    %v1455 = vmul.f32 %v1424, %v1424
    %v1456 = vmul.f32 %v1425, %v1425
    %v1457 = vmul.f32 %v1426, %v1426
    %v1458 = vmul.f32 %v1427, %v1427
    %v1459 = vsel %vm195, %v1451, 0.0
    %v1460 = vsel %vm195, %v1452, 0.0
    %v1461 = vadd.f32 %v1459, %v1460
    %v1462 = vsel %vm195, %v1453, 0.0
    %v1463 = vadd.f32 %v1461, %v1462
    %v1464 = vsel %vm195, %v1454, 0.0
    %v1465 = vadd.f32 %v1463, %v1464
    %v1466 = vsel %vm195, %v1455, 0.0
    %v1467 = vadd.f32 %v1465, %v1466
    %v1468 = vsel %vm195, %v1456, 0.0
    %v1469 = vadd.f32 %v1467, %v1468
    %v1470 = vsel %vm195, %v1457, 0.0
    %v1471 = vadd.f32 %v1469, %v1470
    %v1472 = vsel %vm195, %v1458, 0.0
    %v1473 = vadd.f32 %v1471, %v1472
    %v1474 = vrot.slane %v1473, 4
    %v1475 = vadd.f32 %v1473, %v1474
    %v1476 = vrot.slane %v1475, 2
    %v1477 = vadd.f32 %v1475, %v1476
    %v1478 = vrot.slane %v1477, 1
    %v1479 = vadd.f32 %v1477, %v1478
    %v1480 = vmul.f32 %v1479, %v1449
    %v1481 = vmul.f32 %v1450, %v1450
    %v1482 = vsub.f32 %v1480, %v1481
    %v1483 = vmax.f32 %v1482, 0.0
    %v1484 = vsub.f32 %v1420, %v1450
    %v1485 = vsub.f32 %v1421, %v1450
    %v1486 = vsub.f32 %v1422, %v1450
    %v1487 = vsub.f32 %v1423, %v1450
    %v1488 = vsub.f32 %v1424, %v1450
    %v1489 = vsub.f32 %v1425, %v1450
    %v1490 = vsub.f32 %v1426, %v1450
    %v1491 = vsub.f32 %v1427, %v1450
    %v1492 = vadd.f32 %v1483, 1e-05
    %v1493 = vrsqrt.pop %v1492
    %v1494 = vmul.f32 %v1484, %v1493
    %v1495 = vmul.f32 %v1485, %v1493
    %v1496 = vmul.f32 %v1486, %v1493
    %v1497 = vmul.f32 %v1487, %v1493
    %v1498 = vmul.f32 %v1488, %v1493
    %v1499 = vmul.f32 %v1489, %v1493
    %v1500 = vmul.f32 %v1490, %v1493
    %v1501 = vmul.f32 %v1491, %v1493
    %v1502 = vmul.f32 %v1494, 0.2
    %v1503 = vmul.f32 %v1495, 0.2
    %v1504 = vmul.f32 %v1496, 0.2
    %v1505 = vmul.f32 %v1497, 0.2
    %v1506 = vmul.f32 %v1498, 0.2
    %v1507 = vmul.f32 %v1499, 0.2
    %v1508 = vmul.f32 %v1500, 0.2
    %v1509 = vmul.f32 %v1501, 0.2
    %v1510 = vmax.f32 %v1494, %v1502
    %v1511 = vmax.f32 %v1495, %v1503
    %v1512 = vmax.f32 %v1496, %v1504
    %v1513 = vmax.f32 %v1497, %v1505
    %v1514 = vmax.f32 %v1498, %v1506
    %v1515 = vmax.f32 %v1499, %v1507
    %v1516 = vmax.f32 %v1500, %v1508
    %v1517 = vmax.f32 %v1501, %v1509
    %1518 = vst.msk [vmem:[#allocation7] sm:$0xff] %vm195, %v1510
    %1519 = vst.msk [vmem:[#allocation7 + $0x8] sm:$0xff] %vm195, %v1511
    %1520 = vst.msk [vmem:[#allocation7 + $0x10] sm:$0xff] %vm195, %v1512
    %1521 = vst.msk [vmem:[#allocation7 + $0x18] sm:$0xff] %vm195, %v1513
    %1522 = vst.msk [vmem:[#allocation7 + $0x20] sm:$0xff] %vm195, %v1514
    %1523 = vst.msk [vmem:[#allocation7 + $0x28] sm:$0xff] %vm195, %v1515
    %1524 = vst.msk [vmem:[#allocation7 + $0x30] sm:$0xff] %vm195, %v1516
    %1525 = vst.msk [vmem:[#allocation7 + $0x38] sm:$0xff] %vm195, %v1517
    // Predicated region
    $region18: #{tpu_custom_call.1} parent=1 // pred_check
      _
    $region19: #{tpu_custom_call.1} parent=1 // pred_check_branch
      %1527 = sbr.rel (0) target = $region21
    $region20: #{tpu_custom_call.1} parent=1 // pred_region
      %s1529 = ssub.s32 1024, 1024
      %1530 = vsyncadd [#allocation4], %s1529
      %s1531 = sshll.u32 [#allocation7], 4
      %s1532 = int_to_ptr.vmem [resolvable:$true] %s1531
      %1537 = dma.vmem_to_hbm [thread:$0]  %s1532, 1024, %s2, [#allocation4], 128, 128, 8
    $region21: #{tpu_custom_call.1} parent=1 // pred_fallthru
      _
    // Predicated region
    $region22: #{tpu_custom_call.1} parent=1 // pred_check
      _
    $region23: #{tpu_custom_call.1} parent=1 // pred_check_branch
      %1539 = sbr.rel (0) target = $region25
    $region24: #{tpu_custom_call.1} parent=1 // pred_region
      %1540 = dma.done [#allocation4], 1024
    $region25: #{tpu_custom_call.1} parent=1 // pred_fallthru
      _
    %1541 = vsyncpa [#allocation3], 1
    %1542 = vsyncpa [#allocation6], 1
    %1543 = vsyncpa [#allocation4], 1

</llo_original>
